<compile_context>
chip_gen: v7x
topology: tpu7x:2x2x1
jax: 0.10.0
libtpu: 0.0.40
codegen_flags: <defaults>
</compile_context>

<pallas_src>
from typing import NamedTuple

import jax
import jax.numpy as jnp
from jax.experimental import pallas as pl
from jax.experimental.pallas import tpu as pltpu

HIDDEN = 64
NUM_HIDDEN_LAYERS = 5                         # get_net default
N_SHARED_LINEAR = NUM_HIDDEN_LAYERS + 2       # Linear(in,64) + 5x Linear(64,64) + Linear(64,64)
LOG_STD_MAX = 2.0
LOG_STD_MIN = -20.0


# --------------------------------------------------------------------------
# Kernel
# --------------------------------------------------------------------------
def policy_kernel(x_ref, w0_ref, wh_ref, b_ref, whead_ref, bhead_ref, out_ref):
    """One batch tile of the full MLP: 7x (Linear+ReLU) -> fused heads.

    x_ref     : (TB, in_dim)   f32
    w0_ref    : (in_dim, 64)   bf16
    wh_ref    : (6, 64, 64)    bf16   (hidden layers 1..6)
    b_ref     : (7, 64)        f32    (all shared-net biases)
    whead_ref : (64, 2A)       bf16   ([Wm | Ws])
    bhead_ref : (1, 2A)        f32    ([bm | bs])
    out_ref   : (TB, 2A)       f32    ([means | stds])
    """
    bf16 = jnp.bfloat16

    h = x_ref[...]                                                   # f32

    # Layer 0: Linear(in_dim, 64) + ReLU  (bf16 operands, f32 accumulate).
    h = jnp.dot(h.astype(bf16), w0_ref[...], preferred_element_type=jnp.float32)
    h = jnp.maximum(h + b_ref[0:1, :], 0.0)

    # Layers 1..6: Linear(64, 64) + ReLU.
    for i in range(wh_ref.shape[0]):
        h = jnp.dot(h.astype(bf16), wh_ref[i], preferred_element_type=jnp.float32)
        h = jnp.maximum(h + b_ref[i + 1:i + 2, :], 0.0)

    # Fused heads: single matmul produces [means | log_stds].
    head = jnp.dot(h.astype(bf16), whead_ref[...],
                   preferred_element_type=jnp.float32) + bhead_ref[...]

    # Lane mask: second half of the lanes is the std head -> clip + exp.
    # NOTE: clip MUST precede exp (bounds the discarded means-half at e^2).
    a = out_ref.shape[-1] // 2
    lane = jax.lax.broadcasted_iota(jnp.int32, head.shape, dimension=1)
    clipped = jnp.clip(head, LOG_STD_MIN, LOG_STD_MAX)
    out_ref[...] = jnp.where(lane >= a, jnp.exp(clipped), head)


# --------------------------------------------------------------------------
# Parameter init / one-time packing
# --------------------------------------------------------------------------
def init_params(key, input_dim, action_dim):
    """Deterministic PyTorch-style init: U(-1/sqrt(fan_in), 1/sqrt(fan_in))."""
    dims = [input_dim] + [HIDDEN] * N_SHARED_LINEAR
    params = {}
    for i in range(N_SHARED_LINEAR):
        key, kw, kb = jax.random.split(key, 3)
        bound = 1.0 / jnp.sqrt(dims[i])
        params[f"W{i}"] = jax.random.uniform(
            kw, (dims[i], dims[i + 1]), jnp.float32, -bound, bound)
        params[f"b{i}"] = jax.random.uniform(
            kb, (1, dims[i + 1]), jnp.float32, -bound, bound)
    for name in ("m", "s"):
        key, kw, kb = jax.random.split(key, 3)
        bound = 1.0 / jnp.sqrt(HIDDEN)
        params[f"W{name}"] = jax.random.uniform(
            kw, (HIDDEN, action_dim), jnp.float32, -bound, bound)
        params[f"b{name}"] = jax.random.uniform(
            kb, (1, action_dim), jnp.float32, -bound, bound)
    return params


class PackedParams(NamedTuple):
    w0: jax.Array      # (in_dim, 64)  bf16
    wh: jax.Array      # (6, 64, 64)   bf16
    b: jax.Array       # (7, 64)       f32
    whead: jax.Array   # (64, 2A)      bf16   [Wm | Ws]
    bhead: jax.Array   # (1, 2A)       f32    [bm | bs]


def pack_params(params) -> PackedParams:
    """Pack the 13 NormalPolicyNet tensors into 5 TPU-friendly arrays.

    Call ONCE (at init / after each optimizer step), not per forward.
    """
    w0 = params["W0"].astype(jnp.bfloat16)                           # (in, 64)
    wh = jnp.stack(
        [params[f"W{i}"] for i in range(1, N_SHARED_LINEAR)]
    ).astype(jnp.bfloat16)                                           # (6, 64, 64)
    b = jnp.concatenate(
        [params[f"b{i}"] for i in range(N_SHARED_LINEAR)], axis=0)   # (7, 64) f32
    whead = jnp.concatenate(
        [params["Wm"], params["Ws"]], axis=1).astype(jnp.bfloat16)   # (64, 2A)
    bhead = jnp.concatenate([params["bm"], params["bs"]], axis=1)    # (1, 2A) f32
    return PackedParams(w0, wh, b, whead, bhead)


# --------------------------------------------------------------------------
# Wrapper
# --------------------------------------------------------------------------
def _choose_tile(batch: int, tile_batch: int) -> int:
    """Batch-tile size.

    * multiple of 8 whenever the batch is actually tiled (sublane constraint);
    * a single full-extent block for small batches (no padding needed);
    * >= 2 grid steps once batch >= 1024 so v7x can shard the "parallel"
      batch axis across both TensorCores (no effect on v5e/v6e).
    """
    tile_batch = max(8, (tile_batch // 8) * 8)
    if batch > tile_batch:
        return tile_batch
    if batch >= 1024:
        half = -(-batch // 2)
        return -(-half // 8) * 8
    return batch


def normal_policy_forward(states, packed: PackedParams, *, tile_batch=1024):
    """Returns (means, stds) — the parameters of Independent(Normal(means, stds), 1)."""
    # TODO(synk): torch.distributions.Independent/Normal has no Pallas
    # equivalent; we return its defining parameters (loc, scale) instead.
    batch, input_dim = states.shape
    two_a = packed.whead.shape[1]
    action_dim = two_a // 2

    tb = _choose_tile(batch, tile_batch)
    grid = (pl.cdiv(batch, tb),)          # ragged last block handled by Pallas

    vmem = pltpu.MemorySpace.VMEM
    in_specs = [
        pl.BlockSpec((tb, input_dim), lambda i: (i, 0), memory_space=vmem),
        # Weights/biases: constant block index -> resident in VMEM, DMA'd once.
        pl.BlockSpec(packed.w0.shape, lambda i: (0, 0), memory_space=vmem),
        pl.BlockSpec(packed.wh.shape, lambda i: (0, 0, 0), memory_space=vmem),
        pl.BlockSpec(packed.b.shape, lambda i: (0, 0), memory_space=vmem),
        pl.BlockSpec(packed.whead.shape, lambda i: (0, 0), memory_space=vmem),
        pl.BlockSpec(packed.bhead.shape, lambda i: (0, 0), memory_space=vmem),
    ]
    out_specs = pl.BlockSpec((tb, two_a), lambda i: (i, 0), memory_space=vmem)

    # Advisory cost estimate so XLA can overlap surrounding graph ops.
    flops = 2 * batch * (input_dim * HIDDEN
                         + (N_SHARED_LINEAR - 1) * HIDDEN * HIDDEN
                         + HIDDEN * two_a)
    weight_bytes = sum(int(a.size) * a.dtype.itemsize for a in packed)
    cost = pl.CostEstimate(
        flops=flops,
        transcendentals=batch * two_a,
        bytes_accessed=int(states.size) * states.dtype.itemsize
                       + batch * two_a * 4 + weight_bytes,
    )

    out = pl.pallas_call(
        policy_kernel,
        out_shape=jax.ShapeDtypeStruct((batch, two_a), jnp.float32),
        grid=grid,
        in_specs=in_specs,
        out_specs=out_specs,
        compiler_params=pltpu.CompilerParams(
            dimension_semantics=("parallel",)),
        cost_estimate=cost,
    )(states, *packed)

    return out[:, :action_dim], out[:, action_dim:]


# --------------------------------------------------------------------------
# Pure-JAX reference (mirrors the kernel's bf16-operand / f32-accumulate math)
# --------------------------------------------------------------------------
def _reference_forward(states, params):
    bf16 = jnp.bfloat16
    h = states
    for i in range(N_SHARED_LINEAR):
        w = params[f"W{i}"].astype(bf16)
        h = jnp.dot(h.astype(bf16), w, preferred_element_type=jnp.float32)
        h = jnp.maximum(h + params[f"b{i}"], 0.0)
    hb = h.astype(bf16)
    means = jnp.dot(hb, params["Wm"].astype(bf16),
                    preferred_element_type=jnp.float32) + params["bm"]
    log_stds = jnp.dot(hb, params["Ws"].astype(bf16),
                       preferred_element_type=jnp.float32) + params["bs"]
    log_stds = jnp.clip(log_stds, LOG_STD_MIN, LOG_STD_MAX)
    return means, jnp.exp(log_stds)


if __name__ == "__main__":
    key = jax.random.PRNGKey(0)
    key, k_x, k_x2, k_p = jax.random.split(key, 4)

    batch, input_dim, action_dim = 8, 16, 8
    states = jax.random.normal(k_x, (batch, input_dim), jnp.float32)
    params = init_params(k_p, input_dim, action_dim)

    # Pack once (NOT per forward call).
    packed = pack_params(params)

    # --- single full-extent block path ---
    means, stds = normal_policy_forward(states, packed)
    means = jax.block_until_ready(means)
    stds = jax.block_until_ready(stds)

    ref_means, ref_stds = _reference_forward(states, params)
    assert means.shape == (batch, action_dim) and stds.shape == (batch, action_dim)
    assert jnp.allclose(means, ref_means, atol=1e-3, rtol=1e-3)
    assert jnp.allclose(stds, ref_stds, atol=1e-3, rtol=1e-3)
    assert bool(jnp.all(stds > 0.0))

    # --- ragged-grid path (batch not a multiple of the tile) ---
    batch2 = 20
    states2 = jax.random.normal(k_x2, (batch2, input_dim), jnp.float32)
    means2, stds2 = normal_policy_forward(states2, packed, tile_batch=16)
    means2 = jax.block_until_ready(means2)
    stds2 = jax.block_until_ready(stds2)

    ref_means2, ref_stds2 = _reference_forward(states2, params)
    assert means2.shape == (batch2, action_dim) and stds2.shape == (batch2, action_dim)
    assert jnp.allclose(means2, ref_means2, atol=1e-3, rtol=1e-3)
    assert jnp.allclose(stds2, ref_stds2, atol=1e-3, rtol=1e-3)
    assert bool(jnp.all(stds2 > 0.0))

    print("KERNEL_OK")
</pallas_src>

<mosaic_0001>
module attributes {stable_mosaic.version = 11 : i64} {
  func.func @policy_kernel(%arg0: i32, %arg1: memref<8x16xf32, #tpu.memory_space<vmem>>, %arg2: memref<16x64xbf16, #tpu.memory_space<vmem>>, %arg3: memref<6x64x64xbf16, #tpu.memory_space<vmem>>, %arg4: memref<7x64xf32, #tpu.memory_space<vmem>>, %arg5: memref<64x16xbf16, #tpu.memory_space<vmem>>, %arg6: memref<1x16xf32, #tpu.memory_space<vmem>>, %arg7: memref<8x16xf32, #tpu.memory_space<vmem>>) attributes {dimension_semantics = [#tpu.dimension_semantics<parallel>], iteration_bounds = array<i64: 1>, scalar_prefetch = 0 : i64, scratch_operands = 0 : i64, tpu.core_type = #tpu.core_type<tc>, window_params = [{transform_indices = @transform_0, window_bounds = array<i64: 8, 16>}, {pipeline_mode = #tpu.pipeline_mode<synchronous>, transform_indices = @transform_1, window_bounds = array<i64: 16, 64>}, {pipeline_mode = #tpu.pipeline_mode<synchronous>, transform_indices = @transform_2, window_bounds = array<i64: 6, 64, 64>}, {pipeline_mode = #tpu.pipeline_mode<synchronous>, transform_indices = @transform_3, window_bounds = array<i64: 7, 64>}, {pipeline_mode = #tpu.pipeline_mode<synchronous>, transform_indices = @transform_4, window_bounds = array<i64: 64, 16>}, {pipeline_mode = #tpu.pipeline_mode<synchronous>, transform_indices = @transform_5, window_bounds = array<i64: 1, 16>}, {transform_indices = @transform_6, window_bounds = array<i64: 8, 16>}]} {
    %c0 = arith.constant 0 : index
    %c0_0 = arith.constant 0 : index
    %0 = vector.load %arg1[%c0, %c0_0] : memref<8x16xf32, #tpu.memory_space<vmem>>, vector<8x16xf32>
    %1 = arith.truncf %0 : vector<8x16xf32> to vector<8x16xbf16>
    %c0_1 = arith.constant 0 : index
    %c0_2 = arith.constant 0 : index
    %2 = vector.load %arg2[%c0_1, %c0_2] : memref<16x64xbf16, #tpu.memory_space<vmem>>, vector<16x64xbf16>
    %cst = arith.constant dense<0.000000e+00> : vector<8x64xf32>
    %3 = tpu.matmul %1, %2, %cst {dimension_numbers = #tpu.dot_dimension_numbers<[1], [0], [0], [1], [0, 0, 1, 1], [], []>} : vector<8x16xbf16>, vector<16x64xbf16>, vector<8x64xf32> -> vector<8x64xf32>
    %c0_3 = arith.constant 0 : index
    %c0_4 = arith.constant 0 : index
    %4 = vector.load %arg4[%c0_3, %c0_4] : memref<7x64xf32, #tpu.memory_space<vmem>>, vector<1x64xf32>
    %5 = vector.broadcast %4 : vector<1x64xf32> to vector<8x64xf32>
    %6 = arith.addf %3, %5 : vector<8x64xf32>
    %cst_5 = arith.constant 0.000000e+00 : f32
    %7 = vector.broadcast %cst_5 : f32 to vector<8x64xf32>
    %8 = arith.maximumf %6, %7 : vector<8x64xf32>
    %9 = arith.truncf %8 : vector<8x64xf32> to vector<8x64xbf16>
    %c0_6 = arith.constant 0 : index
    %c0_7 = arith.constant 0 : index
    %c0_8 = arith.constant 0 : index
    %10 = vector.load %arg3[%c0_6, %c0_7, %c0_8] : memref<6x64x64xbf16, #tpu.memory_space<vmem>>, vector<1x64x64xbf16>
    %11 = vector.shape_cast %10 : vector<1x64x64xbf16> to vector<64x64xbf16>
    %cst_9 = arith.constant dense<0.000000e+00> : vector<8x64xf32>
    %12 = tpu.matmul %9, %11, %cst_9 {dimension_numbers = #tpu.dot_dimension_numbers<[1], [0], [0], [1], [0, 0, 1, 1], [], []>} : vector<8x64xbf16>, vector<64x64xbf16>, vector<8x64xf32> -> vector<8x64xf32>
    %c1 = arith.constant 1 : index
    %c0_10 = arith.constant 0 : index
    %13 = vector.load %arg4[%c1, %c0_10] : memref<7x64xf32, #tpu.memory_space<vmem>>, vector<1x64xf32>
    %14 = vector.broadcast %13 : vector<1x64xf32> to vector<8x64xf32>
    %15 = arith.addf %12, %14 : vector<8x64xf32>
    %cst_11 = arith.constant 0.000000e+00 : f32
    %16 = vector.broadcast %cst_11 : f32 to vector<8x64xf32>
    %17 = arith.maximumf %15, %16 : vector<8x64xf32>
    %18 = arith.truncf %17 : vector<8x64xf32> to vector<8x64xbf16>
    %c1_12 = arith.constant 1 : index
    %c0_13 = arith.constant 0 : index
    %c0_14 = arith.constant 0 : index
    %19 = vector.load %arg3[%c1_12, %c0_13, %c0_14] : memref<6x64x64xbf16, #tpu.memory_space<vmem>>, vector<1x64x64xbf16>
    %20 = vector.shape_cast %19 : vector<1x64x64xbf16> to vector<64x64xbf16>
    %cst_15 = arith.constant dense<0.000000e+00> : vector<8x64xf32>
    %21 = tpu.matmul %18, %20, %cst_15 {dimension_numbers = #tpu.dot_dimension_numbers<[1], [0], [0], [1], [0, 0, 1, 1], [], []>} : vector<8x64xbf16>, vector<64x64xbf16>, vector<8x64xf32> -> vector<8x64xf32>
    %c2 = arith.constant 2 : index
    %c0_16 = arith.constant 0 : index
    %22 = vector.load %arg4[%c2, %c0_16] : memref<7x64xf32, #tpu.memory_space<vmem>>, vector<1x64xf32>
    %23 = vector.broadcast %22 : vector<1x64xf32> to vector<8x64xf32>
    %24 = arith.addf %21, %23 : vector<8x64xf32>
    %cst_17 = arith.constant 0.000000e+00 : f32
    %25 = vector.broadcast %cst_17 : f32 to vector<8x64xf32>
    %26 = arith.maximumf %24, %25 : vector<8x64xf32>
    %27 = arith.truncf %26 : vector<8x64xf32> to vector<8x64xbf16>
    %c2_18 = arith.constant 2 : index
    %c0_19 = arith.constant 0 : index
    %c0_20 = arith.constant 0 : index
    %28 = vector.load %arg3[%c2_18, %c0_19, %c0_20] : memref<6x64x64xbf16, #tpu.memory_space<vmem>>, vector<1x64x64xbf16>
    %29 = vector.shape_cast %28 : vector<1x64x64xbf16> to vector<64x64xbf16>
    %cst_21 = arith.constant dense<0.000000e+00> : vector<8x64xf32>
    %30 = tpu.matmul %27, %29, %cst_21 {dimension_numbers = #tpu.dot_dimension_numbers<[1], [0], [0], [1], [0, 0, 1, 1], [], []>} : vector<8x64xbf16>, vector<64x64xbf16>, vector<8x64xf32> -> vector<8x64xf32>
    %c3 = arith.constant 3 : index
    %c0_22 = arith.constant 0 : index
    %31 = vector.load %arg4[%c3, %c0_22] : memref<7x64xf32, #tpu.memory_space<vmem>>, vector<1x64xf32>
    %32 = vector.broadcast %31 : vector<1x64xf32> to vector<8x64xf32>
    %33 = arith.addf %30, %32 : vector<8x64xf32>
    %cst_23 = arith.constant 0.000000e+00 : f32
    %34 = vector.broadcast %cst_23 : f32 to vector<8x64xf32>
    %35 = arith.maximumf %33, %34 : vector<8x64xf32>
    %36 = arith.truncf %35 : vector<8x64xf32> to vector<8x64xbf16>
    %c3_24 = arith.constant 3 : index
    %c0_25 = arith.constant 0 : index
    %c0_26 = arith.constant 0 : index
    %37 = vector.load %arg3[%c3_24, %c0_25, %c0_26] : memref<6x64x64xbf16, #tpu.memory_space<vmem>>, vector<1x64x64xbf16>
    %38 = vector.shape_cast %37 : vector<1x64x64xbf16> to vector<64x64xbf16>
    %cst_27 = arith.constant dense<0.000000e+00> : vector<8x64xf32>
    %39 = tpu.matmul %36, %38, %cst_27 {dimension_numbers = #tpu.dot_dimension_numbers<[1], [0], [0], [1], [0, 0, 1, 1], [], []>} : vector<8x64xbf16>, vector<64x64xbf16>, vector<8x64xf32> -> vector<8x64xf32>
    %c4 = arith.constant 4 : index
    %c0_28 = arith.constant 0 : index
    %40 = vector.load %arg4[%c4, %c0_28] : memref<7x64xf32, #tpu.memory_space<vmem>>, vector<1x64xf32>
    %41 = vector.broadcast %40 : vector<1x64xf32> to vector<8x64xf32>
    %42 = arith.addf %39, %41 : vector<8x64xf32>
    %cst_29 = arith.constant 0.000000e+00 : f32
    %43 = vector.broadcast %cst_29 : f32 to vector<8x64xf32>
    %44 = arith.maximumf %42, %43 : vector<8x64xf32>
    %45 = arith.truncf %44 : vector<8x64xf32> to vector<8x64xbf16>
    %c4_30 = arith.constant 4 : index
    %c0_31 = arith.constant 0 : index
    %c0_32 = arith.constant 0 : index
    %46 = vector.load %arg3[%c4_30, %c0_31, %c0_32] : memref<6x64x64xbf16, #tpu.memory_space<vmem>>, vector<1x64x64xbf16>
    %47 = vector.shape_cast %46 : vector<1x64x64xbf16> to vector<64x64xbf16>
    %cst_33 = arith.constant dense<0.000000e+00> : vector<8x64xf32>
    %48 = tpu.matmul %45, %47, %cst_33 {dimension_numbers = #tpu.dot_dimension_numbers<[1], [0], [0], [1], [0, 0, 1, 1], [], []>} : vector<8x64xbf16>, vector<64x64xbf16>, vector<8x64xf32> -> vector<8x64xf32>
    %c5 = arith.constant 5 : index
    %c0_34 = arith.constant 0 : index
    %49 = vector.load %arg4[%c5, %c0_34] : memref<7x64xf32, #tpu.memory_space<vmem>>, vector<1x64xf32>
    %50 = vector.broadcast %49 : vector<1x64xf32> to vector<8x64xf32>
    %51 = arith.addf %48, %50 : vector<8x64xf32>
    %cst_35 = arith.constant 0.000000e+00 : f32
    %52 = vector.broadcast %cst_35 : f32 to vector<8x64xf32>
    %53 = arith.maximumf %51, %52 : vector<8x64xf32>
    %54 = arith.truncf %53 : vector<8x64xf32> to vector<8x64xbf16>
    %c5_36 = arith.constant 5 : index
    %c0_37 = arith.constant 0 : index
    %c0_38 = arith.constant 0 : index
    %55 = vector.load %arg3[%c5_36, %c0_37, %c0_38] : memref<6x64x64xbf16, #tpu.memory_space<vmem>>, vector<1x64x64xbf16>
    %56 = vector.shape_cast %55 : vector<1x64x64xbf16> to vector<64x64xbf16>
    %cst_39 = arith.constant dense<0.000000e+00> : vector<8x64xf32>
    %57 = tpu.matmul %54, %56, %cst_39 {dimension_numbers = #tpu.dot_dimension_numbers<[1], [0], [0], [1], [0, 0, 1, 1], [], []>} : vector<8x64xbf16>, vector<64x64xbf16>, vector<8x64xf32> -> vector<8x64xf32>
    %c6 = arith.constant 6 : index
    %c0_40 = arith.constant 0 : index
    %58 = vector.load %arg4[%c6, %c0_40] : memref<7x64xf32, #tpu.memory_space<vmem>>, vector<1x64xf32>
    %59 = vector.broadcast %58 : vector<1x64xf32> to vector<8x64xf32>
    %60 = arith.addf %57, %59 : vector<8x64xf32>
    %cst_41 = arith.constant 0.000000e+00 : f32
    %61 = vector.broadcast %cst_41 : f32 to vector<8x64xf32>
    %62 = arith.maximumf %60, %61 : vector<8x64xf32>
    %63 = arith.truncf %62 : vector<8x64xf32> to vector<8x64xbf16>
    %c0_42 = arith.constant 0 : index
    %c0_43 = arith.constant 0 : index
    %64 = vector.load %arg5[%c0_42, %c0_43] : memref<64x16xbf16, #tpu.memory_space<vmem>>, vector<64x16xbf16>
    %cst_44 = arith.constant dense<0.000000e+00> : vector<8x16xf32>
    %65 = tpu.matmul %63, %64, %cst_44 {dimension_numbers = #tpu.dot_dimension_numbers<[1], [0], [0], [1], [0, 0, 1, 1], [], []>} : vector<8x64xbf16>, vector<64x16xbf16>, vector<8x16xf32> -> vector<8x16xf32>
    %c0_45 = arith.constant 0 : index
    %c0_46 = arith.constant 0 : index
    %66 = vector.load %arg6[%c0_45, %c0_46] : memref<1x16xf32, #tpu.memory_space<vmem>>, vector<1x16xf32>
    %67 = vector.broadcast %66 : vector<1x16xf32> to vector<8x16xf32>
    %68 = arith.addf %65, %67 : vector<8x16xf32>
    %69 = tpu.iota {dimensions = array<i32: 1>} : vector<8x16xi32>
    %cst_47 = arith.constant -2.000000e+01 : f32
    %cst_48 = arith.constant 2.000000e+00 : f32
    %70 = vector.broadcast %cst_47 : f32 to vector<8x16xf32>
    %71 = arith.maximumf %70, %68 : vector<8x16xf32>
    %72 = vector.broadcast %cst_48 : f32 to vector<8x16xf32>
    %73 = arith.minimumf %72, %71 : vector<8x16xf32>
    %c8_i32 = arith.constant 8 : i32
    %74 = vector.broadcast %c8_i32 : i32 to vector<8x16xi32>
    %75 = arith.cmpi sge, %69, %74 : vector<8x16xi32>
    %76 = math.exp %73 : vector<8x16xf32>
    %77 = arith.select %75, %76, %68 : vector<8x16xi1>, vector<8x16xf32>
    %c0_49 = arith.constant 0 : index
    %c0_50 = arith.constant 0 : index
    %78 = vector.load %arg7[%c0_49, %c0_50] : memref<8x16xf32, #tpu.memory_space<vmem>>, vector<8x16xf32>
    tpu.vector_store %arg7[%c0_49, %c0_50], %77 {strides = array<i32>} : memref<8x16xf32, #tpu.memory_space<vmem>>, vector<8x16xf32>,
    return
  }
  func.func @transform_0(%arg0: i32) -> (i32, i32) {
    %c0_i32 = arith.constant 0 : i32
    %c0_i32_0 = arith.constant 0 : i32
    return %arg0, %c0_i32 : i32, i32
  }
  func.func @transform_1(%arg0: i32) -> (i32, i32) {
    %c0_i32 = arith.constant 0 : i32
    %c0_i32_0 = arith.constant 0 : i32
    %c0_i32_1 = arith.constant 0 : i32
    return %c0_i32, %c0_i32_0 : i32, i32
  }
  func.func @transform_2(%arg0: i32) -> (i32, i32, i32) {
    %c0_i32 = arith.constant 0 : i32
    %c0_i32_0 = arith.constant 0 : i32
    %c0_i32_1 = arith.constant 0 : i32
    %c0_i32_2 = arith.constant 0 : i32
    return %c0_i32, %c0_i32_0, %c0_i32_1 : i32, i32, i32
  }
  func.func @transform_3(%arg0: i32) -> (i32, i32) {
    %c0_i32 = arith.constant 0 : i32
    %c0_i32_0 = arith.constant 0 : i32
    %c0_i32_1 = arith.constant 0 : i32
    return %c0_i32, %c0_i32_0 : i32, i32
  }
  func.func @transform_4(%arg0: i32) -> (i32, i32) {
    %c0_i32 = arith.constant 0 : i32
    %c0_i32_0 = arith.constant 0 : i32
    %c0_i32_1 = arith.constant 0 : i32
    return %c0_i32, %c0_i32_0 : i32, i32
  }
  func.func @transform_5(%arg0: i32) -> (i32, i32) {
    %c0_i32 = arith.constant 0 : i32
    %c0_i32_0 = arith.constant 0 : i32
    %c0_i32_1 = arith.constant 0 : i32
    return %c0_i32, %c0_i32_0 : i32, i32
  }
  func.func @transform_6(%arg0: i32) -> (i32, i32) {
    %c0_i32 = arith.constant 0 : i32
    %c0_i32_0 = arith.constant 0 : i32
    return %arg0, %c0_i32 : i32, i32
  }
}

</mosaic_0001>

<llo_original>
// kernel: tpu_custom_call.1
$region0: #{tpu_custom_call.1}
  #allocation0 [shape = 'u32[]', space=smem, size = 0x4, offset = 0x4, fixed_abs, tag = 'smem constant byte address 0x4 - core index']
  #allocation1 [shape = 'u32[144,128]{1,0:T(1,128)}', space=vmem, size = 0x12000, scoped, tag = 'internal scratch']
  %s0 = inlined_call_operand.vmem [shape: f32[8,16], index: 0, kind: input, shape index: {}]
  %s1 = inlined_call_operand.vmem [shape: bf16[16,64], index: 1, kind: input, shape index: {}]
  %s2 = inlined_call_operand.hbm [shape: bf16[6,64,64], index: 2, kind: input, shape index: {}]
  %s3 = inlined_call_operand.vmem [shape: f32[7,64], index: 3, kind: input, shape index: {}]
  %s4 = inlined_call_operand.vmem [shape: bf16[64,16], index: 4, kind: input, shape index: {}]
  %s5 = inlined_call_operand.vmem [shape: f32[1,16], index: 5, kind: input, shape index: {}]
  %s6 = inlined_call_operand.hbm [shape: f32[8,16], index: 6, kind: output, shape index: {}]
  %s7 = sld [smem:[#allocation0]]
  $region38: #{tpu_custom_call.1} parent=0
    _
  %s9 = ssub.s32 1, %s7
  %s10 = scalar_select 0, %s9, %s7
  $region1: #{tpu_custom_call.1} parent=0
    #allocation2 [shape = 'u8[98304]{0}', space=vmem, size = 0x18000, scoped, tag = 'input window, operand 2, single buffered']
    #allocation3 [shape = 's32[1]{0}', space=sflag, size = 0x4, scoped, tag = 'scoped memory for tpu_custom_call.1']
    #allocation4 [shape = 's32[1]{0}', space=sflag, size = 0x4, scoped, tag = 'scoped memory for tpu_custom_call.1']
    #allocation5 [shape = 'u8[4096]{0}', space=vmem, size = 0x1000, scoped, tag = 'output window, operand 0, single buffered']
    %11 = vsyncpa [#allocation3], 0
    %12 = vsyncpa [#allocation4], 0
    // Predicated region
    $region2: #{tpu_custom_call.1} parent=1 // pred_check
      _
    $region3: #{tpu_custom_call.1} parent=1 // pred_check_branch
      %14 = sbr.rel (0) target = $region5
    $region4: #{tpu_custom_call.1} parent=1 // pred_region
      _
    $region5: #{tpu_custom_call.1} parent=1 // pred_fallthru
      _
    // Predicated region
    $region6: #{tpu_custom_call.1} parent=1 // pred_check
      _
    $region7: #{tpu_custom_call.1} parent=1 // pred_check_branch
      %16 = sbr.rel (0) target = $region9
    $region8: #{tpu_custom_call.1} parent=1 // pred_region
      _
    $region9: #{tpu_custom_call.1} parent=1 // pred_fallthru
      _
    // Predicated region
    $region10: #{tpu_custom_call.1} parent=1 // pred_check
      _
    $region11: #{tpu_custom_call.1} parent=1 // pred_check_branch
      %18 = sbr.rel (0) target = $region13
    $region12: #{tpu_custom_call.1} parent=1 // pred_region
      %s20 = ssub.s32 3072, 3072
      %21 = vsyncadd [#allocation3], %s20
      %s22 = sshll.u32 [#allocation2], 4
      %s23 = int_to_ptr.vmem [resolvable:$true] %s22
      %28 = dma.hbm_to_vmem [thread:$0]  %s2, 3072, %s23, [#allocation3], 64, 64, 4
    $region13: #{tpu_custom_call.1} parent=1 // pred_fallthru
      _
    // Predicated region
    $region14: #{tpu_custom_call.1} parent=1 // pred_check
      _
    $region15: #{tpu_custom_call.1} parent=1 // pred_check_branch
      %30 = sbr.rel (0) target = $region17
    $region16: #{tpu_custom_call.1} parent=1 // pred_region
      _
    $region17: #{tpu_custom_call.1} parent=1 // pred_fallthru
      _
    // Predicated region
    $region18: #{tpu_custom_call.1} parent=1 // pred_check
      _
    $region19: #{tpu_custom_call.1} parent=1 // pred_check_branch
      %32 = sbr.rel (0) target = $region21
    $region20: #{tpu_custom_call.1} parent=1 // pred_region
      _
    $region21: #{tpu_custom_call.1} parent=1 // pred_fallthru
      _
    // Predicated region
    $region22: #{tpu_custom_call.1} parent=1 // pred_check
      _
    $region23: #{tpu_custom_call.1} parent=1 // pred_check_branch
      %34 = sbr.rel (0) target = $region25
    $region24: #{tpu_custom_call.1} parent=1 // pred_region
      _
    $region25: #{tpu_custom_call.1} parent=1 // pred_fallthru
      _
    // Predicated region
    $region26: #{tpu_custom_call.1} parent=1 // pred_check
      _
    $region27: #{tpu_custom_call.1} parent=1 // pred_check_branch
      %36 = sbr.rel (0) target = $region29
    $region28: #{tpu_custom_call.1} parent=1 // pred_region
      %37 = dma.done [#allocation3], 3072
    $region29: #{tpu_custom_call.1} parent=1 // pred_fallthru
      _
    %v39 = vld [vmem:[%s0] sm:$0xff]
    %v40 = vpack.c.bf16 %v39, %v39
    %v41 = vld [vmem:[%s1] sm:$0xf]
    %v42 = vld [vmem:[%s1 + $0x4] sm:$0xf]
    %v43 = vld [vmem:[%s3] sm:$0x1]
    %v44 = vlaneseq
    %v45 = vshrl.u32 %v44, 7
    %v46 = vsub.s32 0, %v45
    %v47 = vrot.slane %v43, %v46
    %v50 = vunpack.c.l.b16 %v41
    %v51 = vunpack.c.l.b16 %v42
    %v52 = vpack.c.b16 %v51, %v50
    %vm54 = vcmask 130048
    %v56 = vsel %vm54, %v40, 0
    %58 = vmatprep.subr.bf16.mxu0 0
    %59 = vmatpush1.bf16.msra.mxu0 %v52
    %60 = vmatprep.subr.bf16.mxu0 0
    %61 = vmatpush1.bf16.msra.mxu0 0
    %62 = vmatprep.subr.bf16.mxu0 0
    %63 = vmatpush1.bf16.msra.mxu0 0
    %64 = vmatprep.subr.bf16.mxu0 0
    %65 = vmatpush1.bf16.msra.mxu0 0
    %66 = vmatprep.subr.bf16.mxu0 0
    %67 = vmatpush1.bf16.msra.mxu0 0
    %68 = vmatprep.subr.bf16.mxu0 0
    %69 = vmatpush1.bf16.msra.mxu0 0
    %70 = vmatprep.subr.bf16.mxu0 0
    %71 = vmatpush1.bf16.msra.mxu0 0
    %72 = vmatprep.subr.bf16.mxu0 0
    %73 = vmatpush1.bf16.msra.mxu0 0
    %74 = vmatprep.subr.bf16.mxu0 0
    %75 = vmatpush1.bf16.msra.mxu0 0
    %76 = vmatprep.subr.bf16.mxu0 0
    %77 = vmatpush1.bf16.msra.mxu0 0
    %78 = vmatprep.subr.bf16.mxu0 0
    %79 = vmatpush1.bf16.msra.mxu0 0
    %80 = vmatprep.subr.bf16.mxu0 0
    %81 = vmatpush1.bf16.msra.mxu0 0
    %82 = vmatprep.subr.bf16.mxu0 0
    %83 = vmatpush1.bf16.msra.mxu0 0
    %84 = vmatprep.subr.bf16.mxu0 0
    %85 = vmatpush1.bf16.msra.mxu0 0
    %86 = vmatprep.subr.bf16.mxu0 0
    %87 = vmatpush1.bf16.msra.mxu0 0
    %88 = vmatprep.subr.bf16.mxu0 0
    %89 = vmatpush1.bf16.msra.mxu0 0
    %90 = vmatprep.mubr.bf16.mxu0 0
    %91 = vmatmul.mubr.bf16.gmra.mrb[0].mxu0 %v56
    %v92 = vpop.f32.mrb[0].mxu0
    %v93 = vadd.f32 %v47, %v92
    %v94 = vpop.f32.mrb[0].mxu0
    %v95 = vpop.f32.mrb[0].mxu0
    %v96 = vpop.f32.mrb[0].mxu0
    %97 = vdwg.mxu0
    %v98 = vmax.f32 %v93, 0.0
    %v99 = vpack.c.bf16 %v98, %v98
    %v100 = vld [vmem:[#allocation2] sm:$0xf]
    %v101 = vld [vmem:[#allocation2 + $0x4] sm:$0xf]
    %v102 = vld [vmem:[#allocation2 + $0x8] sm:$0xf]
    %v103 = vld [vmem:[#allocation2 + $0xc] sm:$0xf]
    %v104 = vld [vmem:[#allocation2 + $0x10] sm:$0xf]
    %v105 = vld [vmem:[#allocation2 + $0x14] sm:$0xf]
    %v106 = vld [vmem:[#allocation2 + $0x18] sm:$0xf]
    %v107 = vld [vmem:[#allocation2 + $0x1c] sm:$0xf]
    %v108 = vld [vmem:[%s3 + $0x1] sm:$0x1]
    %v109 = vlaneseq
    %v110 = vshrl.u32 %v109, 7
    %v111 = vsub.s32 0, %v110
    %v112 = vrot.slane %v108, %v111
    %v121 = vunpack.c.l.b16 %v100
    %v122 = vunpack.c.l.b16 %v101
    %v123 = vunpack.c.l.b16 %v102
    %v124 = vunpack.c.l.b16 %v103
    %v125 = vunpack.c.l.b16 %v104
    %v126 = vunpack.c.l.b16 %v105
    %v127 = vunpack.c.l.b16 %v106
    %v128 = vunpack.c.l.b16 %v107
    %v129 = vpack.c.b16 %v122, %v121
    %v130 = vpack.c.b16 %v124, %v123
    %v131 = vpack.c.b16 %v126, %v125
    %v132 = vpack.c.b16 %v128, %v127
    %vm137 = vcmask 523264
    %v139 = vsel %vm137, %v99, 0
    %141 = vmatprep.subr.bf16.mxu0 0
    %142 = vmatpush1.bf16.msra.mxu0 %v129
    %143 = vmatprep.subr.bf16.mxu0 0
    %144 = vmatpush1.bf16.msra.mxu0 %v130
    %145 = vmatprep.subr.bf16.mxu0 0
    %146 = vmatpush1.bf16.msra.mxu0 %v131
    %147 = vmatprep.subr.bf16.mxu0 0
    %148 = vmatpush1.bf16.msra.mxu0 %v132
    %149 = vmatprep.subr.bf16.mxu0 0
    %150 = vmatpush1.bf16.msra.mxu0 0
    %151 = vmatprep.subr.bf16.mxu0 0
    %152 = vmatpush1.bf16.msra.mxu0 0
    %153 = vmatprep.subr.bf16.mxu0 0
    %154 = vmatpush1.bf16.msra.mxu0 0
    %155 = vmatprep.subr.bf16.mxu0 0
    %156 = vmatpush1.bf16.msra.mxu0 0
    %157 = vmatprep.subr.bf16.mxu0 0
    %158 = vmatpush1.bf16.msra.mxu0 0
    %159 = vmatprep.subr.bf16.mxu0 0
    %160 = vmatpush1.bf16.msra.mxu0 0
    %161 = vmatprep.subr.bf16.mxu0 0
    %162 = vmatpush1.bf16.msra.mxu0 0
    %163 = vmatprep.subr.bf16.mxu0 0
    %164 = vmatpush1.bf16.msra.mxu0 0
    %165 = vmatprep.subr.bf16.mxu0 0
    %166 = vmatpush1.bf16.msra.mxu0 0
    %167 = vmatprep.subr.bf16.mxu0 0
    %168 = vmatpush1.bf16.msra.mxu0 0
    %169 = vmatprep.subr.bf16.mxu0 0
    %170 = vmatpush1.bf16.msra.mxu0 0
    %171 = vmatprep.subr.bf16.mxu0 0
    %172 = vmatpush1.bf16.msra.mxu0 0
    %173 = vmatprep.mubr.bf16.mxu0 0
    %174 = vmatmul.mubr.bf16.gmra.mrb[0].mxu0 %v139
    %v175 = vpop.f32.mrb[0].mxu0
    %v176 = vadd.f32 %v112, %v175
    %v177 = vpop.f32.mrb[0].mxu0
    %v178 = vpop.f32.mrb[0].mxu0
    %v179 = vpop.f32.mrb[0].mxu0
    %180 = vdwg.mxu0
    %v181 = vmax.f32 %v176, 0.0
    %v182 = vpack.c.bf16 %v181, %v181
    %s183 = scalar_lea.vmem [#allocation2], 32
    %v184 = vld [vmem:[%s183] sm:$0xf]
    %v185 = vld [vmem:[%s183 + $0x4] sm:$0xf]
    %v186 = vld [vmem:[%s183 + $0x8] sm:$0xf]
    %v187 = vld [vmem:[%s183 + $0xc] sm:$0xf]
    %v188 = vld [vmem:[%s183 + $0x10] sm:$0xf]
    %v189 = vld [vmem:[%s183 + $0x14] sm:$0xf]
    %v190 = vld [vmem:[%s183 + $0x18] sm:$0xf]
    %v191 = vld [vmem:[%s183 + $0x1c] sm:$0xf]
    %v192 = vld [vmem:[%s3 + $0x2] sm:$0x1]
    %v193 = vlaneseq
    %v194 = vshrl.u32 %v193, 7
    %v195 = vsub.s32 0, %v194
    %v196 = vrot.slane %v192, %v195
    %v205 = vunpack.c.l.b16 %v184
    %v206 = vunpack.c.l.b16 %v185
    %v207 = vunpack.c.l.b16 %v186
    %v208 = vunpack.c.l.b16 %v187
    %v209 = vunpack.c.l.b16 %v188
    %v210 = vunpack.c.l.b16 %v189
    %v211 = vunpack.c.l.b16 %v190
    %v212 = vunpack.c.l.b16 %v191
    %v213 = vpack.c.b16 %v206, %v205
    %v214 = vpack.c.b16 %v208, %v207
    %v215 = vpack.c.b16 %v210, %v209
    %v216 = vpack.c.b16 %v212, %v211
    %v222 = vsel %vm137, %v182, 0
    %224 = vmatprep.subr.bf16.mxu0 0
    %225 = vmatpush1.bf16.msra.mxu0 %v213
    %226 = vmatprep.subr.bf16.mxu0 0
    %227 = vmatpush1.bf16.msra.mxu0 %v214
    %228 = vmatprep.subr.bf16.mxu0 0
    %229 = vmatpush1.bf16.msra.mxu0 %v215
    %230 = vmatprep.subr.bf16.mxu0 0
    %231 = vmatpush1.bf16.msra.mxu0 %v216
    %232 = vmatprep.subr.bf16.mxu0 0
    %233 = vmatpush1.bf16.msra.mxu0 0
    %234 = vmatprep.subr.bf16.mxu0 0
    %235 = vmatpush1.bf16.msra.mxu0 0
    %236 = vmatprep.subr.bf16.mxu0 0
    %237 = vmatpush1.bf16.msra.mxu0 0
    %238 = vmatprep.subr.bf16.mxu0 0
    %239 = vmatpush1.bf16.msra.mxu0 0
    %240 = vmatprep.subr.bf16.mxu0 0
    %241 = vmatpush1.bf16.msra.mxu0 0
    %242 = vmatprep.subr.bf16.mxu0 0
    %243 = vmatpush1.bf16.msra.mxu0 0
    %244 = vmatprep.subr.bf16.mxu0 0
    %245 = vmatpush1.bf16.msra.mxu0 0
    %246 = vmatprep.subr.bf16.mxu0 0
    %247 = vmatpush1.bf16.msra.mxu0 0
    %248 = vmatprep.subr.bf16.mxu0 0
    %249 = vmatpush1.bf16.msra.mxu0 0
    %250 = vmatprep.subr.bf16.mxu0 0
    %251 = vmatpush1.bf16.msra.mxu0 0
    %252 = vmatprep.subr.bf16.mxu0 0
    %253 = vmatpush1.bf16.msra.mxu0 0
    %254 = vmatprep.subr.bf16.mxu0 0
    %255 = vmatpush1.bf16.msra.mxu0 0
    %256 = vmatprep.mubr.bf16.mxu0 0
    %257 = vmatmul.mubr.bf16.gmra.mrb[0].mxu0 %v222
    %v258 = vpop.f32.mrb[0].mxu0
    %v259 = vadd.f32 %v196, %v258
    %v260 = vpop.f32.mrb[0].mxu0
    %v261 = vpop.f32.mrb[0].mxu0
    %v262 = vpop.f32.mrb[0].mxu0
    %263 = vdwg.mxu0
    %v264 = vmax.f32 %v259, 0.0
    %v265 = vpack.c.bf16 %v264, %v264
    %s266 = scalar_lea.vmem [#allocation2], 64
    %v267 = vld [vmem:[%s266] sm:$0xf]
    %v268 = vld [vmem:[%s266 + $0x4] sm:$0xf]
    %v269 = vld [vmem:[%s266 + $0x8] sm:$0xf]
    %v270 = vld [vmem:[%s266 + $0xc] sm:$0xf]
    %v271 = vld [vmem:[%s266 + $0x10] sm:$0xf]
    %v272 = vld [vmem:[%s266 + $0x14] sm:$0xf]
    %v273 = vld [vmem:[%s266 + $0x18] sm:$0xf]
    %v274 = vld [vmem:[%s266 + $0x1c] sm:$0xf]
    %v275 = vld [vmem:[%s3 + $0x3] sm:$0x1]
    %v276 = vlaneseq
    %v277 = vshrl.u32 %v276, 7
    %v278 = vsub.s32 0, %v277
    %v279 = vrot.slane %v275, %v278
    %v288 = vunpack.c.l.b16 %v267
    %v289 = vunpack.c.l.b16 %v268
    %v290 = vunpack.c.l.b16 %v269
    %v291 = vunpack.c.l.b16 %v270
    %v292 = vunpack.c.l.b16 %v271
    %v293 = vunpack.c.l.b16 %v272
    %v294 = vunpack.c.l.b16 %v273
    %v295 = vunpack.c.l.b16 %v274
    %v296 = vpack.c.b16 %v289, %v288
    %v297 = vpack.c.b16 %v291, %v290
    %v298 = vpack.c.b16 %v293, %v292
    %v299 = vpack.c.b16 %v295, %v294
    %v305 = vsel %vm137, %v265, 0
    %307 = vmatprep.subr.bf16.mxu0 0
    %308 = vmatpush1.bf16.msra.mxu0 %v296
    %309 = vmatprep.subr.bf16.mxu0 0
    %310 = vmatpush1.bf16.msra.mxu0 %v297
    %311 = vmatprep.subr.bf16.mxu0 0
    %312 = vmatpush1.bf16.msra.mxu0 %v298
    %313 = vmatprep.subr.bf16.mxu0 0
    %314 = vmatpush1.bf16.msra.mxu0 %v299
    %315 = vmatprep.subr.bf16.mxu0 0
    %316 = vmatpush1.bf16.msra.mxu0 0
    %317 = vmatprep.subr.bf16.mxu0 0
    %318 = vmatpush1.bf16.msra.mxu0 0
    %319 = vmatprep.subr.bf16.mxu0 0
    %320 = vmatpush1.bf16.msra.mxu0 0
    %321 = vmatprep.subr.bf16.mxu0 0
    %322 = vmatpush1.bf16.msra.mxu0 0
    %323 = vmatprep.subr.bf16.mxu0 0
    %324 = vmatpush1.bf16.msra.mxu0 0
    %325 = vmatprep.subr.bf16.mxu0 0
    %326 = vmatpush1.bf16.msra.mxu0 0
    %327 = vmatprep.subr.bf16.mxu0 0
    %328 = vmatpush1.bf16.msra.mxu0 0
    %329 = vmatprep.subr.bf16.mxu0 0
    %330 = vmatpush1.bf16.msra.mxu0 0
    %331 = vmatprep.subr.bf16.mxu0 0
    %332 = vmatpush1.bf16.msra.mxu0 0
    %333 = vmatprep.subr.bf16.mxu0 0
    %334 = vmatpush1.bf16.msra.mxu0 0
    %335 = vmatprep.subr.bf16.mxu0 0
    %336 = vmatpush1.bf16.msra.mxu0 0
    %337 = vmatprep.subr.bf16.mxu0 0
    %338 = vmatpush1.bf16.msra.mxu0 0
    %339 = vmatprep.mubr.bf16.mxu0 0
    %340 = vmatmul.mubr.bf16.gmra.mrb[0].mxu0 %v305
    %v341 = vpop.f32.mrb[0].mxu0
    %v342 = vadd.f32 %v279, %v341
    %v343 = vpop.f32.mrb[0].mxu0
    %v344 = vpop.f32.mrb[0].mxu0
    %v345 = vpop.f32.mrb[0].mxu0
    %346 = vdwg.mxu0
    %v347 = vmax.f32 %v342, 0.0
    %v348 = vpack.c.bf16 %v347, %v347
    %s349 = scalar_lea.vmem [#allocation2], 96
    %v350 = vld [vmem:[%s349] sm:$0xf]
    %v351 = vld [vmem:[%s349 + $0x4] sm:$0xf]
    %v352 = vld [vmem:[%s349 + $0x8] sm:$0xf]
    %v353 = vld [vmem:[%s349 + $0xc] sm:$0xf]
    %v354 = vld [vmem:[%s349 + $0x10] sm:$0xf]
    %v355 = vld [vmem:[%s349 + $0x14] sm:$0xf]
    %v356 = vld [vmem:[%s349 + $0x18] sm:$0xf]
    %v357 = vld [vmem:[%s349 + $0x1c] sm:$0xf]
    %v358 = vld [vmem:[%s3 + $0x4] sm:$0x1]
    %v359 = vlaneseq
    %v360 = vshrl.u32 %v359, 7
    %v361 = vsub.s32 0, %v360
    %v362 = vrot.slane %v358, %v361
    %v371 = vunpack.c.l.b16 %v350
    %v372 = vunpack.c.l.b16 %v351
    %v373 = vunpack.c.l.b16 %v352
    %v374 = vunpack.c.l.b16 %v353
    %v375 = vunpack.c.l.b16 %v354
    %v376 = vunpack.c.l.b16 %v355
    %v377 = vunpack.c.l.b16 %v356
    %v378 = vunpack.c.l.b16 %v357
    %v379 = vpack.c.b16 %v372, %v371
    %v380 = vpack.c.b16 %v374, %v373
    %v381 = vpack.c.b16 %v376, %v375
    %v382 = vpack.c.b16 %v378, %v377
    %v388 = vsel %vm137, %v348, 0
    %390 = vmatprep.subr.bf16.mxu0 0
    %391 = vmatpush1.bf16.msra.mxu0 %v379
    %392 = vmatprep.subr.bf16.mxu0 0
    %393 = vmatpush1.bf16.msra.mxu0 %v380
    %394 = vmatprep.subr.bf16.mxu0 0
    %395 = vmatpush1.bf16.msra.mxu0 %v381
    %396 = vmatprep.subr.bf16.mxu0 0
    %397 = vmatpush1.bf16.msra.mxu0 %v382
    %398 = vmatprep.subr.bf16.mxu0 0
    %399 = vmatpush1.bf16.msra.mxu0 0
    %400 = vmatprep.subr.bf16.mxu0 0
    %401 = vmatpush1.bf16.msra.mxu0 0
    %402 = vmatprep.subr.bf16.mxu0 0
    %403 = vmatpush1.bf16.msra.mxu0 0
    %404 = vmatprep.subr.bf16.mxu0 0
    %405 = vmatpush1.bf16.msra.mxu0 0
    %406 = vmatprep.subr.bf16.mxu0 0
    %407 = vmatpush1.bf16.msra.mxu0 0
    %408 = vmatprep.subr.bf16.mxu0 0
    %409 = vmatpush1.bf16.msra.mxu0 0
    %410 = vmatprep.subr.bf16.mxu0 0
    %411 = vmatpush1.bf16.msra.mxu0 0
    %412 = vmatprep.subr.bf16.mxu0 0
    %413 = vmatpush1.bf16.msra.mxu0 0
    %414 = vmatprep.subr.bf16.mxu0 0
    %415 = vmatpush1.bf16.msra.mxu0 0
    %416 = vmatprep.subr.bf16.mxu0 0
    %417 = vmatpush1.bf16.msra.mxu0 0
    %418 = vmatprep.subr.bf16.mxu0 0
    %419 = vmatpush1.bf16.msra.mxu0 0
    %420 = vmatprep.subr.bf16.mxu0 0
    %421 = vmatpush1.bf16.msra.mxu0 0
    %422 = vmatprep.mubr.bf16.mxu0 0
    %423 = vmatmul.mubr.bf16.gmra.mrb[0].mxu0 %v388
    %v424 = vpop.f32.mrb[0].mxu0
    %v425 = vadd.f32 %v362, %v424
    %v426 = vpop.f32.mrb[0].mxu0
    %v427 = vpop.f32.mrb[0].mxu0
    %v428 = vpop.f32.mrb[0].mxu0
    %429 = vdwg.mxu0
    %v430 = vmax.f32 %v425, 0.0
    %v431 = vpack.c.bf16 %v430, %v430
    %s432 = scalar_lea.vmem [#allocation2], 128
    %v433 = vld [vmem:[%s432] sm:$0xf]
    %v434 = vld [vmem:[%s432 + $0x4] sm:$0xf]
    %v435 = vld [vmem:[%s432 + $0x8] sm:$0xf]
    %v436 = vld [vmem:[%s432 + $0xc] sm:$0xf]
    %v437 = vld [vmem:[%s432 + $0x10] sm:$0xf]
    %v438 = vld [vmem:[%s432 + $0x14] sm:$0xf]
    %v439 = vld [vmem:[%s432 + $0x18] sm:$0xf]
    %v440 = vld [vmem:[%s432 + $0x1c] sm:$0xf]
    %v441 = vld [vmem:[%s3 + $0x5] sm:$0x1]
    %v442 = vlaneseq
    %v443 = vshrl.u32 %v442, 7
    %v444 = vsub.s32 0, %v443
    %v445 = vrot.slane %v441, %v444
    %v454 = vunpack.c.l.b16 %v433
    %v455 = vunpack.c.l.b16 %v434
    %v456 = vunpack.c.l.b16 %v435
    %v457 = vunpack.c.l.b16 %v436
    %v458 = vunpack.c.l.b16 %v437
    %v459 = vunpack.c.l.b16 %v438
    %v460 = vunpack.c.l.b16 %v439
    %v461 = vunpack.c.l.b16 %v440
    %v462 = vpack.c.b16 %v455, %v454
    %v463 = vpack.c.b16 %v457, %v456
    %v464 = vpack.c.b16 %v459, %v458
    %v465 = vpack.c.b16 %v461, %v460
    %v471 = vsel %vm137, %v431, 0
    %473 = vmatprep.subr.bf16.mxu0 0
    %474 = vmatpush1.bf16.msra.mxu0 %v462
    %475 = vmatprep.subr.bf16.mxu0 0
    %476 = vmatpush1.bf16.msra.mxu0 %v463
    %477 = vmatprep.subr.bf16.mxu0 0
    %478 = vmatpush1.bf16.msra.mxu0 %v464
    %479 = vmatprep.subr.bf16.mxu0 0
    %480 = vmatpush1.bf16.msra.mxu0 %v465
    %481 = vmatprep.subr.bf16.mxu0 0
    %482 = vmatpush1.bf16.msra.mxu0 0
    %483 = vmatprep.subr.bf16.mxu0 0
    %484 = vmatpush1.bf16.msra.mxu0 0
    %485 = vmatprep.subr.bf16.mxu0 0
    %486 = vmatpush1.bf16.msra.mxu0 0
    %487 = vmatprep.subr.bf16.mxu0 0
    %488 = vmatpush1.bf16.msra.mxu0 0
    %489 = vmatprep.subr.bf16.mxu0 0
    %490 = vmatpush1.bf16.msra.mxu0 0
    %491 = vmatprep.subr.bf16.mxu0 0
    %492 = vmatpush1.bf16.msra.mxu0 0
    %493 = vmatprep.subr.bf16.mxu0 0
    %494 = vmatpush1.bf16.msra.mxu0 0
    %495 = vmatprep.subr.bf16.mxu0 0
    %496 = vmatpush1.bf16.msra.mxu0 0
    %497 = vmatprep.subr.bf16.mxu0 0
    %498 = vmatpush1.bf16.msra.mxu0 0
    %499 = vmatprep.subr.bf16.mxu0 0
    %500 = vmatpush1.bf16.msra.mxu0 0
    %501 = vmatprep.subr.bf16.mxu0 0
    %502 = vmatpush1.bf16.msra.mxu0 0
    %503 = vmatprep.subr.bf16.mxu0 0
    %504 = vmatpush1.bf16.msra.mxu0 0
    %505 = vmatprep.mubr.bf16.mxu0 0
    %506 = vmatmul.mubr.bf16.gmra.mrb[0].mxu0 %v471
    %v507 = vpop.f32.mrb[0].mxu0
    %v508 = vadd.f32 %v445, %v507
    %v509 = vpop.f32.mrb[0].mxu0
    %v510 = vpop.f32.mrb[0].mxu0
    %v511 = vpop.f32.mrb[0].mxu0
    %512 = vdwg.mxu0
    %v513 = vmax.f32 %v508, 0.0
    %v514 = vpack.c.bf16 %v513, %v513
    %s515 = scalar_lea.vmem [#allocation2], 160
    %v516 = vld [vmem:[%s515] sm:$0xf]
    %v517 = vld [vmem:[%s515 + $0x4] sm:$0xf]
    %v518 = vld [vmem:[%s515 + $0x8] sm:$0xf]
    %v519 = vld [vmem:[%s515 + $0xc] sm:$0xf]
    %v520 = vld [vmem:[%s515 + $0x10] sm:$0xf]
    %v521 = vld [vmem:[%s515 + $0x14] sm:$0xf]
    %v522 = vld [vmem:[%s515 + $0x18] sm:$0xf]
    %v523 = vld [vmem:[%s515 + $0x1c] sm:$0xf]
    %v524 = vld [vmem:[%s3 + $0x6] sm:$0x1]
    %v525 = vlaneseq
    %v526 = vshrl.u32 %v525, 7
    %v527 = vsub.s32 0, %v526
    %v528 = vrot.slane %v524, %v527
    %v537 = vunpack.c.l.b16 %v516
    %v538 = vunpack.c.l.b16 %v517
    %v539 = vunpack.c.l.b16 %v518
    %v540 = vunpack.c.l.b16 %v519
    %v541 = vunpack.c.l.b16 %v520
    %v542 = vunpack.c.l.b16 %v521
    %v543 = vunpack.c.l.b16 %v522
    %v544 = vunpack.c.l.b16 %v523
    %v545 = vpack.c.b16 %v538, %v537
    %v546 = vpack.c.b16 %v540, %v539
    %v547 = vpack.c.b16 %v542, %v541
    %v548 = vpack.c.b16 %v544, %v543
    %v554 = vsel %vm137, %v514, 0
    %556 = vmatprep.subr.bf16.mxu0 0
    %557 = vmatpush1.bf16.msra.mxu0 %v545
    %558 = vmatprep.subr.bf16.mxu0 0
    %559 = vmatpush1.bf16.msra.mxu0 %v546
    %560 = vmatprep.subr.bf16.mxu0 0
    %561 = vmatpush1.bf16.msra.mxu0 %v547
    %562 = vmatprep.subr.bf16.mxu0 0
    %563 = vmatpush1.bf16.msra.mxu0 %v548
    %564 = vmatprep.subr.bf16.mxu0 0
    %565 = vmatpush1.bf16.msra.mxu0 0
    %566 = vmatprep.subr.bf16.mxu0 0
    %567 = vmatpush1.bf16.msra.mxu0 0
    %568 = vmatprep.subr.bf16.mxu0 0
    %569 = vmatpush1.bf16.msra.mxu0 0
    %570 = vmatprep.subr.bf16.mxu0 0
    %571 = vmatpush1.bf16.msra.mxu0 0
    %572 = vmatprep.subr.bf16.mxu0 0
    %573 = vmatpush1.bf16.msra.mxu0 0
    %574 = vmatprep.subr.bf16.mxu0 0
    %575 = vmatpush1.bf16.msra.mxu0 0
    %576 = vmatprep.subr.bf16.mxu0 0
    %577 = vmatpush1.bf16.msra.mxu0 0
    %578 = vmatprep.subr.bf16.mxu0 0
    %579 = vmatpush1.bf16.msra.mxu0 0
    %580 = vmatprep.subr.bf16.mxu0 0
    %581 = vmatpush1.bf16.msra.mxu0 0
    %582 = vmatprep.subr.bf16.mxu0 0
    %583 = vmatpush1.bf16.msra.mxu0 0
    %584 = vmatprep.subr.bf16.mxu0 0
    %585 = vmatpush1.bf16.msra.mxu0 0
    %586 = vmatprep.subr.bf16.mxu0 0
    %587 = vmatpush1.bf16.msra.mxu0 0
    %588 = vmatprep.mubr.bf16.mxu0 0
    %589 = vmatmul.mubr.bf16.gmra.mrb[0].mxu0 %v554
    %v590 = vpop.f32.mrb[0].mxu0
    %v591 = vadd.f32 %v528, %v590
    %v592 = vpop.f32.mrb[0].mxu0
    %v593 = vpop.f32.mrb[0].mxu0
    %v594 = vpop.f32.mrb[0].mxu0
    %595 = vdwg.mxu0
    %v596 = vmax.f32 %v591, 0.0
    %v597 = vpack.c.bf16 %v596, %v596
    %v598 = vld [vmem:[%s4] sm:$0xf]
    %v599 = vld [vmem:[%s4 + $0x4] sm:$0xf]
    %v600 = vld [vmem:[%s4 + $0x8] sm:$0xf]
    %v601 = vld [vmem:[%s4 + $0xc] sm:$0xf]
    %v602 = vld [vmem:[%s4 + $0x10] sm:$0xf]
    %v603 = vld [vmem:[%s4 + $0x14] sm:$0xf]
    %v604 = vld [vmem:[%s4 + $0x18] sm:$0xf]
    %v605 = vld [vmem:[%s4 + $0x1c] sm:$0xf]
    %v606 = vld [vmem:[%s5] sm:$0x1]
    %v608 = vlaneseq
    %v609 = vshrl.u32 %v608, 7
    %v610 = vsub.s32 0, %v609
    %v611 = vrot.slane %v606, %v610
    %v621 = vunpack.c.l.b16 %v598
    %v622 = vunpack.c.l.b16 %v599
    %v623 = vunpack.c.l.b16 %v600
    %v624 = vunpack.c.l.b16 %v601
    %v625 = vunpack.c.l.b16 %v602
    %v626 = vunpack.c.l.b16 %v603
    %v627 = vunpack.c.l.b16 %v604
    %v628 = vunpack.c.l.b16 %v605
    %v629 = vpack.c.b16 %v622, %v621
    %v630 = vpack.c.b16 %v624, %v623
    %v631 = vpack.c.b16 %v626, %v625
    %v632 = vpack.c.b16 %v628, %v627
    %v638 = vsel %vm137, %v597, 0
    %640 = vmatprep.subr.bf16.mxu0 0
    %641 = vmatpush1.bf16.msra.mxu0 %v629
    %642 = vmatprep.subr.bf16.mxu0 0
    %643 = vmatpush1.bf16.msra.mxu0 %v630
    %644 = vmatprep.subr.bf16.mxu0 0
    %645 = vmatpush1.bf16.msra.mxu0 %v631
    %646 = vmatprep.subr.bf16.mxu0 0
    %647 = vmatpush1.bf16.msra.mxu0 %v632
    %648 = vmatprep.subr.bf16.mxu0 0
    %649 = vmatpush1.bf16.msra.mxu0 0
    %650 = vmatprep.subr.bf16.mxu0 0
    %651 = vmatpush1.bf16.msra.mxu0 0
    %652 = vmatprep.subr.bf16.mxu0 0
    %653 = vmatpush1.bf16.msra.mxu0 0
    %654 = vmatprep.subr.bf16.mxu0 0
    %655 = vmatpush1.bf16.msra.mxu0 0
    %656 = vmatprep.subr.bf16.mxu0 0
    %657 = vmatpush1.bf16.msra.mxu0 0
    %658 = vmatprep.subr.bf16.mxu0 0
    %659 = vmatpush1.bf16.msra.mxu0 0
    %660 = vmatprep.subr.bf16.mxu0 0
    %661 = vmatpush1.bf16.msra.mxu0 0
    %662 = vmatprep.subr.bf16.mxu0 0
    %663 = vmatpush1.bf16.msra.mxu0 0
    %664 = vmatprep.subr.bf16.mxu0 0
    %665 = vmatpush1.bf16.msra.mxu0 0
    %666 = vmatprep.subr.bf16.mxu0 0
    %667 = vmatpush1.bf16.msra.mxu0 0
    %668 = vmatprep.subr.bf16.mxu0 0
    %669 = vmatpush1.bf16.msra.mxu0 0
    %670 = vmatprep.subr.bf16.mxu0 0
    %671 = vmatpush1.bf16.msra.mxu0 0
    %672 = vmatprep.mubr.bf16.mxu0 0
    %673 = vmatmul.mubr.bf16.gmra.mrb[0].mxu0 %v638
    %v674 = vpop.f32.mrb[0].mxu0
    %v675 = vadd.f32 %v611, %v674
    %v676 = vpop.f32.mrb[0].mxu0
    %v677 = vpop.f32.mrb[0].mxu0
    %v678 = vpop.f32.mrb[0].mxu0
    %679 = vdwg.mxu0
    %v680 = vlaneseq
    %v681 = vand.u32 %v680, 127
    %v682 = vmax.f32 %v675, -20.0
    %v683 = vmin.f32 %v682, 2.0
    %vm684 = vcmp.ge.s32.totalorder %v681, 8
    %v685 = vmul.f32 %v683, 1.442695
    %v686 = vpow.pop %v685
    %v687 = vsel %vm684, %v686, %v675
    %688 = vst.msk [vmem:[#allocation5] sm:$0xff] %vm54, %v687
    // Predicated region
    $region30: #{tpu_custom_call.1} parent=1 // pred_check
      _
    $region31: #{tpu_custom_call.1} parent=1 // pred_check_branch
      %690 = sbr.rel (0) target = $region33
    $region32: #{tpu_custom_call.1} parent=1 // pred_region
      %s692 = ssub.s32 128, 128
      %693 = vsyncadd [#allocation4], %s692
      %s695 = sshll.u32 [#allocation5], 4
      %s696 = int_to_ptr.vmem [resolvable:$true] %s695
      %698 = dma.vmem_to_hbm [thread:$0]  %s696, 128, %s6, [#allocation4]
    $region33: #{tpu_custom_call.1} parent=1 // pred_fallthru
      _
    // Predicated region
    $region34: #{tpu_custom_call.1} parent=1 // pred_check
      _
    $region35: #{tpu_custom_call.1} parent=1 // pred_check_branch
      %700 = sbr.rel (0) target = $region37
    $region36: #{tpu_custom_call.1} parent=1 // pred_region
      %701 = dma.done [#allocation4], 128
    $region37: #{tpu_custom_call.1} parent=1 // pred_fallthru
      _
    %702 = vsyncpa [#allocation3], 1
    %703 = vsyncpa [#allocation4], 1

</llo_original>
